<compile_context>
chip_gen: v5e
topology: v5e:2x2
jax: 0.10.0
libtpu: 0.0.40
codegen_flags: <defaults>
</compile_context>

<pallas_src>
import functools

import jax
import jax.numpy as jnp
from jax import lax
from jax.experimental import pallas as pl
from jax.experimental.pallas import tpu as pltpu


# --------------------------------------------------------------------------
# Kernels
# --------------------------------------------------------------------------

def _fused_kernel(x_ref, w1_ref, b1_ref, w2_ref, b2_ref, o_ref):
    """One batch-tile: pooling + shared MLP + gating, single HBM read/write."""
    bt = x_ref.shape[0]
    hw = x_ref.shape[-1]

    # ---- pooling in f32 (single traversal of the loaded tile) ----
    x_f32 = x_ref[...].astype(jnp.float32)           # (Bt, C, HW)
    pooled_max = jnp.max(x_f32, axis=-1)              # (Bt, C)
    pooled_avg = jnp.sum(x_f32, axis=-1) * (1.0 / hw)  # (Bt, C)

    # ---- shared MLP evaluated once on the stacked (2*Bt, C) matrix ----
    pooled = jnp.concatenate([pooled_max, pooled_avg], axis=0)        # (2*Bt, C)
    h = jnp.dot(pooled, w1_ref[...].astype(jnp.float32),
                preferred_element_type=jnp.float32)
    h = jnp.maximum(h + b1_ref[...].astype(jnp.float32), 0.0)         # ReLU
    y = jnp.dot(h, w2_ref[...].astype(jnp.float32),
                preferred_element_type=jnp.float32)
    y = y + b2_ref[...].astype(jnp.float32)                           # (2*Bt, C)

    # mlp(max) + mlp(avg)  (add after the 2nd matmul; identical math)
    attn = jax.nn.sigmoid(y[:bt] + y[bt:])                            # (Bt, C) f32

    # ---- gate: re-read x from VMEM; multiply in the input dtype ----
    gate = attn.astype(o_ref.dtype)[:, :, None]                       # (Bt, C, 1)
    o_ref[...] = (x_ref[...] * gate).astype(o_ref.dtype)


def _pool_mlp_kernel(x_ref, w1_ref, b1_ref, w2_ref, b2_ref, attn_ref,
                     max_sc, sum_sc, *, hw_total, hw_tile):
    """Fallback pass 1: HW-tiled pooling + MLP, emits attn of shape (1,1,C)."""
    h = pl.program_id(1)

    @pl.when(h == 0)
    def _():
        max_sc[...] = jnp.full_like(max_sc, -jnp.inf)
        sum_sc[...] = jnp.zeros_like(sum_sc)

    x = x_ref[...].astype(jnp.float32)                         # (1, C, hw_tile)
    # Mask the padded tail of the last (partial) HW block.
    pos = lax.broadcasted_iota(jnp.int32, x.shape, 2) + h * hw_tile
    valid = pos < hw_total
    max_sc[...] = jnp.maximum(
        max_sc[...], jnp.max(jnp.where(valid, x, -jnp.inf), axis=-1))
    sum_sc[...] = sum_sc[...] + jnp.sum(jnp.where(valid, x, 0.0), axis=-1)

    @pl.when(h == pl.num_programs(1) - 1)
    def _():
        pooled_max = max_sc[...]                                # (1, C)
        pooled_avg = sum_sc[...] * (1.0 / hw_total)             # (1, C)
        pooled = jnp.concatenate([pooled_max, pooled_avg], axis=0)   # (2, C)
        hmid = jnp.dot(pooled, w1_ref[...].astype(jnp.float32),
                       preferred_element_type=jnp.float32)
        hmid = jnp.maximum(hmid + b1_ref[...].astype(jnp.float32), 0.0)
        y = jnp.dot(hmid, w2_ref[...].astype(jnp.float32),
                    preferred_element_type=jnp.float32)
        y = y + b2_ref[...].astype(jnp.float32)                 # (2, C)
        attn = jax.nn.sigmoid(y[:1] + y[1:])                    # (1, C)
        attn_ref[...] = attn.reshape(attn_ref.shape)            # (1, 1, C), no relayout


def _gate_kernel(x_ref, attn_ref, o_ref):
    """Fallback pass 2: per-(batch, HW-tile) gating; attn arrives as (1, C, 1)."""
    gate = attn_ref[...].astype(o_ref.dtype)                    # (1, C, 1)
    o_ref[...] = (x_ref[...] * gate).astype(o_ref.dtype)


# --------------------------------------------------------------------------
# Tiling / VMEM planning
# --------------------------------------------------------------------------

def _round_up(x, m):
    return (x + m - 1) // m * m


def _vmem_plan():
    """Generation-aware (budget_for_pipelined_tiles, vmem_limit_bytes)."""
    phys = 64 << 20                     # conservative default = v7x per-TC VMEM
    try:
        info = pltpu.get_tpu_info()
        phys = int(getattr(info, "vmem_capacity_bytes", phys))
    except Exception:
        pass
    # ~60% of physical VMEM for the double-buffered x/out tiles, capped at
    # 48 MiB; leave room for residents + compiler-internal scratch.
    budget = min(int(phys * 0.6), 48 << 20)
    limit = min(phys - (8 << 20), budget + (16 << 20))
    limit = max(int(limit), 32 << 20)
    return budget, limit


def _num_tensorcores():
    try:
        kind = jax.devices()[0].device_kind.lower()
        if "v7" in kind:                # v7x: 2 TensorCores per chip
            return 2
    except Exception:
        pass
    return 1                            # v5e / v6e: single TensorCore


def _sublane(itemsize):
    return max(8, 32 // max(itemsize, 1))   # 8 for f32, 16 for bf16, 32 for int8


def _pick_batch_tile(B, C, HW, itemsize, vmem_budget_bytes, num_cores):
    """Returns batches per grid step for the fused path, or 0 if it can't fit."""
    # Padding-aware per-batch per-buffer bytes (sublane + 128-lane rounding).
    per_batch = _round_up(C, _sublane(itemsize)) * _round_up(HW, 128) * itemsize

    # in + out, double-buffered => 4 live buffers.
    fit = vmem_budget_bytes // (4 * per_batch)
    if fit < 1:
        return 0                        # single batch doesn't fit -> two-pass path

    # Per-buffer sweet spot: ~1-8 MiB hits ~85% of HBM roofline (v6e sweep);
    # larger tiles buy <2% and burn VMEM (matters most under v7x's 64 MiB).
    sweet = max(1, (8 << 20) // per_batch)

    bt = int(min(B, fit, sweet))

    # v7x: keep >= 2 grid steps per TensorCore when B allows so the batch axis
    # shards across both cores and the pipeline prologue/tail stays hidden.
    # Single-TC chips (v5e/v6e): no forced split -- pure VMEM/tile criterion.
    if num_cores > 1 and B > 1:
        min_steps = min(B, 2 * num_cores)
        bt = min(bt, max(1, B // min_steps))

    while B % bt:
        bt -= 1
    return bt


def _pick_hw_tile(C, HW, itemsize, vmem_budget_bytes):
    """HW tile (multiple of 128) for the two-pass fallback."""
    c_row_bytes = _round_up(C, _sublane(itemsize)) * itemsize
    per_buffer_cap = max(1, min(8 << 20, vmem_budget_bytes // 4))
    hw_tile = (per_buffer_cap // c_row_bytes) // 128 * 128
    hw_tile = max(128, hw_tile)
    hw_tile = min(hw_tile, _round_up(HW, 128))
    return int(hw_tile)


# --------------------------------------------------------------------------
# Wrapper
# --------------------------------------------------------------------------

def channel_attention(x, w1, b1, w2, b2, *, batch_tile=None, hw_tile=None,
                      force_two_pass=False):
    """x: (B, C, H, W).  w1: (C, hid), b1: (hid,), w2: (hid, C), b2: (C,)."""
    B, C, H, W = x.shape
    HW = H * W
    hid = w1.shape[1]
    itemsize = jnp.dtype(x.dtype).itemsize

    vmem_budget, vmem_limit = _vmem_plan()
    num_cores = _num_tensorcores()

    x_flat = x.reshape(B, C, HW)
    b1_2d = b1.reshape(1, hid)
    b2_2d = b2.reshape(1, C)

    use_two_pass = force_two_pass
    if not use_two_pass:
        if batch_tile is None:
            batch_tile = _pick_batch_tile(B, C, HW, itemsize, vmem_budget,
                                          num_cores)
        use_two_pass = (batch_tile == 0)

    if not use_two_pass:
        # ---------------- fused single-pass path ----------------
        assert B % batch_tile == 0
        out_flat = pl.pallas_call(
            _fused_kernel,
            out_shape=jax.ShapeDtypeStruct((B, C, HW), x.dtype),
            grid_spec=pltpu.PrefetchScalarGridSpec(
                num_scalar_prefetch=0,
                grid=(B // batch_tile,),
                in_specs=[
                    pl.BlockSpec((batch_tile, C, HW), lambda b: (b, 0, 0)),  # x
                    pl.BlockSpec((C, hid),            lambda b: (0, 0)),     # w1
                    pl.BlockSpec((1, hid),            lambda b: (0, 0)),     # b1
                    pl.BlockSpec((hid, C),            lambda b: (0, 0)),     # w2
                    pl.BlockSpec((1, C),              lambda b: (0, 0)),     # b2
                ],
                out_specs=pl.BlockSpec((batch_tile, C, HW), lambda b: (b, 0, 0)),
            ),
            compiler_params=pltpu.CompilerParams(
                dimension_semantics=("parallel",),
                vmem_limit_bytes=vmem_limit),
        )(x_flat, w1, b1_2d, w2, b2_2d)
        return out_flat.reshape(B, C, H, W)

    # ---------------- two-pass fallback (huge C * HW per batch) ----------------
    if hw_tile is None:
        hw_tile = _pick_hw_tile(C, HW, itemsize, vmem_budget)
    n_hw = pl.cdiv(HW, hw_tile)

    # Pass 1: pooling + MLP -> attn (B, 1, C), keeping C on lanes.
    attn = pl.pallas_call(
        functools.partial(_pool_mlp_kernel, hw_total=HW, hw_tile=hw_tile),
        out_shape=jax.ShapeDtypeStruct((B, 1, C), jnp.float32),
        grid_spec=pltpu.PrefetchScalarGridSpec(
            num_scalar_prefetch=0,
            grid=(B, n_hw),
            in_specs=[
                pl.BlockSpec((1, C, hw_tile), lambda b, h: (b, 0, h)),
                pl.BlockSpec((C, hid),        lambda b, h: (0, 0)),
                pl.BlockSpec((1, hid),        lambda b, h: (0, 0)),
                pl.BlockSpec((hid, C),        lambda b, h: (0, 0)),
                pl.BlockSpec((1, C),          lambda b, h: (0, 0)),
            ],
            out_specs=pl.BlockSpec((1, 1, C), lambda b, h: (b, 0, 0)),
            scratch_shapes=[pltpu.VMEM((1, C), jnp.float32),   # running max
                            pltpu.VMEM((1, C), jnp.float32)],  # running sum
        ),
        compiler_params=pltpu.CompilerParams(
            dimension_semantics=("parallel", "arbitrary"),
            vmem_limit_bytes=vmem_limit),
    )(x_flat, w1, b1_2d, w2, b2_2d)

    # One cheap lane->sublane relayout in XLA (outside the kernel), so the
    # gating pass gets a directly broadcastable (B, C, 1) tensor.
    attn_c1 = attn.reshape(B, C, 1)

    # Pass 2: gating, tiled over (batch, HW).
    out_flat = pl.pallas_call(
        _gate_kernel,
        out_shape=jax.ShapeDtypeStruct((B, C, HW), x.dtype),
        grid_spec=pltpu.PrefetchScalarGridSpec(
            num_scalar_prefetch=0,
            grid=(B, n_hw),
            in_specs=[
                pl.BlockSpec((1, C, hw_tile), lambda b, h: (b, 0, h)),
                pl.BlockSpec((1, C, 1),       lambda b, h: (b, 0, 0)),
            ],
            out_specs=pl.BlockSpec((1, C, hw_tile), lambda b, h: (b, 0, h)),
        ),
        compiler_params=pltpu.CompilerParams(
            dimension_semantics=("parallel", "parallel"),
            vmem_limit_bytes=vmem_limit),
    )(x_flat, attn_c1)

    return out_flat.reshape(B, C, H, W)


def channel_attention_ref(x, w1, b1, w2, b2):
    """Pure-JAX reference mirroring the PyTorch forward."""
    pooled_max = jnp.max(x, axis=(2, 3))    # (B, C)
    pooled_avg = jnp.mean(x, axis=(2, 3))   # (B, C)

    def mlp(v):
        h = jnp.maximum(v @ w1 + b1, 0.0)
        return h @ w2 + b2

    attn = jax.nn.sigmoid(mlp(pooled_max) + mlp(pooled_avg))   # (B, C)
    return x * attn[:, :, None, None]


if __name__ == "__main__":
    # Shapes consistent with the module: in_channels divisible by
    # reduction_ratio=16, so C=32 -> hidden=2.
    B, C, H, W = 2, 32, 16, 16
    reduction_ratio = 16
    hid = C // reduction_ratio

    key = jax.random.PRNGKey(0)
    kx, k1, k2, k3, k4 = jax.random.split(key, 5)

    x = jax.random.normal(kx, (B, C, H, W), dtype=jnp.float32)

    # Deterministic synthetic parameters for the shared MLP (stored as
    # (in, out) matrices; PyTorch Linear would store the transpose).
    w1 = jax.random.normal(k1, (C, hid), dtype=jnp.float32) * 0.1   # Linear(C -> C//r)
    b1 = jax.random.normal(k2, (hid,), dtype=jnp.float32) * 0.1
    w2 = jax.random.normal(k3, (hid, C), dtype=jnp.float32) * 0.1   # Linear(C//r -> C)
    b2 = jax.random.normal(k4, (C,), dtype=jnp.float32) * 0.1

    # --- fused single-pass path ---
    out = channel_attention(x, w1, b1, w2, b2)
    jax.block_until_ready(out)
    ref = channel_attention_ref(x, w1, b1, w2, b2)
    assert out.shape == x.shape and out.dtype == x.dtype
    assert jnp.allclose(out, ref, atol=1e-5, rtol=1e-5), "fused path mismatch"

    # --- two-pass fallback path (HW-tiled pooling, incl. partial last block) ---
    x2 = jax.random.normal(kx, (B, C, 12, 12), dtype=jnp.float32)   # HW=144
    out2 = channel_attention(x2, w1, b1, w2, b2,
                             force_two_pass=True, hw_tile=128)
    jax.block_until_ready(out2)
    ref2 = channel_attention_ref(x2, w1, b1, w2, b2)
    assert jnp.allclose(out2, ref2, atol=1e-5, rtol=1e-5), "two-pass mismatch"

    print("KERNEL_OK")
</pallas_src>

<mosaic_0001>
module attributes {stable_mosaic.version = 11 : i64} {
  func.func @_fused_kernel(%arg0: i32, %arg1: memref<2x32x256xf32, #tpu.memory_space<vmem>>, %arg2: memref<32x2xf32, #tpu.memory_space<vmem>>, %arg3: memref<1x2xf32, #tpu.memory_space<vmem>>, %arg4: memref<2x32xf32, #tpu.memory_space<vmem>>, %arg5: memref<1x32xf32, #tpu.memory_space<vmem>>, %arg6: memref<2x32x256xf32, #tpu.memory_space<vmem>>) attributes {dimension_semantics = [#tpu.dimension_semantics<parallel>], iteration_bounds = array<i64: 1>, scalar_prefetch = 0 : i64, scratch_operands = 0 : i64, tpu.core_type = #tpu.core_type<tc>, window_params = [{transform_indices = @transform_0, window_bounds = array<i64: 2, 32, 256>}, {pipeline_mode = #tpu.pipeline_mode<synchronous>, transform_indices = @transform_1, window_bounds = array<i64: 32, 2>}, {pipeline_mode = #tpu.pipeline_mode<synchronous>, transform_indices = @transform_2, window_bounds = array<i64: 1, 2>}, {pipeline_mode = #tpu.pipeline_mode<synchronous>, transform_indices = @transform_3, window_bounds = array<i64: 2, 32>}, {pipeline_mode = #tpu.pipeline_mode<synchronous>, transform_indices = @transform_4, window_bounds = array<i64: 1, 32>}, {transform_indices = @transform_5, window_bounds = array<i64: 2, 32, 256>}]} {
    %c0 = arith.constant 0 : index
    %c0_0 = arith.constant 0 : index
    %c0_1 = arith.constant 0 : index
    %0 = vector.load %arg1[%c0, %c0_0, %c0_1] : memref<2x32x256xf32, #tpu.memory_space<vmem>>, vector<2x32x256xf32>
    %cst = arith.constant dense<0xFF800000> : vector<2x32xf32>
    %1 = vector.multi_reduction <maximumf>, %0, %cst [2] : vector<2x32x256xf32> to vector<2x32xf32>
    %cst_2 = arith.constant dense<0.000000e+00> : vector<2x32xf32>
    %2 = vector.multi_reduction <add>, %0, %cst_2 [2] : vector<2x32x256xf32> to vector<2x32xf32>
    %cst_3 = arith.constant 3.906250e-03 : f32
    %3 = vector.broadcast %cst_3 : f32 to vector<2x32xf32>
    %4 = arith.mulf %2, %3 : vector<2x32xf32>
    %5 = tpu.concatenate %1, %4 in 0 : vector<2x32xf32>, vector<2x32xf32> -> vector<4x32xf32>
    %c0_4 = arith.constant 0 : index
    %c0_5 = arith.constant 0 : index
    %6 = vector.load %arg2[%c0_4, %c0_5] : memref<32x2xf32, #tpu.memory_space<vmem>>, vector<32x2xf32>
    %cst_6 = arith.constant dense<0.000000e+00> : vector<4x2xf32>
    %7 = tpu.matmul %5, %6, %cst_6 {dimension_numbers = #tpu.dot_dimension_numbers<[1], [0], [0], [1], [0, 0, 1, 1], [], []>} : vector<4x32xf32>, vector<32x2xf32>, vector<4x2xf32> -> vector<4x2xf32>
    %c0_7 = arith.constant 0 : index
    %c0_8 = arith.constant 0 : index
    %8 = vector.load %arg3[%c0_7, %c0_8] : memref<1x2xf32, #tpu.memory_space<vmem>>, vector<1x2xf32>
    %9 = vector.broadcast %8 : vector<1x2xf32> to vector<4x2xf32>
    %10 = arith.addf %7, %9 : vector<4x2xf32>
    %cst_9 = arith.constant 0.000000e+00 : f32
    %11 = vector.broadcast %cst_9 : f32 to vector<4x2xf32>
    %12 = arith.maximumf %10, %11 : vector<4x2xf32>
    %c0_10 = arith.constant 0 : index
    %c0_11 = arith.constant 0 : index
    %13 = vector.load %arg4[%c0_10, %c0_11] : memref<2x32xf32, #tpu.memory_space<vmem>>, vector<2x32xf32>
    %cst_12 = arith.constant dense<0.000000e+00> : vector<4x32xf32>
    %14 = tpu.matmul %12, %13, %cst_12 {dimension_numbers = #tpu.dot_dimension_numbers<[1], [0], [0], [1], [0, 0, 1, 1], [], []>} : vector<4x2xf32>, vector<2x32xf32>, vector<4x32xf32> -> vector<4x32xf32>
    %c0_13 = arith.constant 0 : index
    %c0_14 = arith.constant 0 : index
    %15 = vector.load %arg5[%c0_13, %c0_14] : memref<1x32xf32, #tpu.memory_space<vmem>>, vector<1x32xf32>
    %16 = vector.broadcast %15 : vector<1x32xf32> to vector<4x32xf32>
    %17 = arith.addf %14, %16 : vector<4x32xf32>
    %18 = vector.extract_strided_slice %17 {offsets = [0, 0], sizes = [2, 32], strides = [1, 1]} : vector<4x32xf32> to vector<2x32xf32>
    %19 = vector.extract_strided_slice %17 {offsets = [2, 0], sizes = [2, 32], strides = [1, 1]} : vector<4x32xf32> to vector<2x32xf32>
    %20 = arith.addf %18, %19 : vector<2x32xf32>
    %21 = arith.negf %20 : vector<2x32xf32>
    %22 = math.exp %21 : vector<2x32xf32>
    %cst_15 = arith.constant 1.000000e+00 : f32
    %23 = vector.broadcast %cst_15 : f32 to vector<2x32xf32>
    %24 = arith.addf %23, %22 : vector<2x32xf32>
    %25 = arith.divf %23, %24 : vector<2x32xf32>
    %26 = vector.shape_cast %25 : vector<2x32xf32> to vector<2x32x1xf32>
    %c0_16 = arith.constant 0 : index
    %c0_17 = arith.constant 0 : index
    %c0_18 = arith.constant 0 : index
    %27 = vector.load %arg1[%c0_16, %c0_17, %c0_18] : memref<2x32x256xf32, #tpu.memory_space<vmem>>, vector<2x32x256xf32>
    %28 = vector.broadcast %26 : vector<2x32x1xf32> to vector<2x32x256xf32>
    %29 = arith.mulf %27, %28 : vector<2x32x256xf32>
    %c0_19 = arith.constant 0 : index
    %c0_20 = arith.constant 0 : index
    %c0_21 = arith.constant 0 : index
    %30 = vector.load %arg6[%c0_19, %c0_20, %c0_21] : memref<2x32x256xf32, #tpu.memory_space<vmem>>, vector<2x32x256xf32>
    tpu.vector_store %arg6[%c0_19, %c0_20, %c0_21], %29 {strides = array<i32>} : memref<2x32x256xf32, #tpu.memory_space<vmem>>, vector<2x32x256xf32>,
    return
  }
  func.func @transform_0(%arg0: i32) -> (i32, i32, i32) {
    %c0_i32 = arith.constant 0 : i32
    %c0_i32_0 = arith.constant 0 : i32
    %c0_i32_1 = arith.constant 0 : i32
    return %arg0, %c0_i32, %c0_i32_0 : i32, i32, i32
  }
  func.func @transform_1(%arg0: i32) -> (i32, i32) {
    %c0_i32 = arith.constant 0 : i32
    %c0_i32_0 = arith.constant 0 : i32
    %c0_i32_1 = arith.constant 0 : i32
    return %c0_i32, %c0_i32_0 : i32, i32
  }
  func.func @transform_2(%arg0: i32) -> (i32, i32) {
    %c0_i32 = arith.constant 0 : i32
    %c0_i32_0 = arith.constant 0 : i32
    %c0_i32_1 = arith.constant 0 : i32
    return %c0_i32, %c0_i32_0 : i32, i32
  }
  func.func @transform_3(%arg0: i32) -> (i32, i32) {
    %c0_i32 = arith.constant 0 : i32
    %c0_i32_0 = arith.constant 0 : i32
    %c0_i32_1 = arith.constant 0 : i32
    return %c0_i32, %c0_i32_0 : i32, i32
  }
  func.func @transform_4(%arg0: i32) -> (i32, i32) {
    %c0_i32 = arith.constant 0 : i32
    %c0_i32_0 = arith.constant 0 : i32
    %c0_i32_1 = arith.constant 0 : i32
    return %c0_i32, %c0_i32_0 : i32, i32
  }
  func.func @transform_5(%arg0: i32) -> (i32, i32, i32) {
    %c0_i32 = arith.constant 0 : i32
    %c0_i32_0 = arith.constant 0 : i32
    %c0_i32_1 = arith.constant 0 : i32
    return %arg0, %c0_i32, %c0_i32_0 : i32, i32, i32
  }
}

</mosaic_0001>

<llo_original>
// kernel: tpu_custom_call.1
$region0: #{tpu_custom_call.1}
  #allocation0 [shape = 'u32[]', space=smem, size = 0x4, offset = 0x4, fixed_abs, tag = 'smem constant byte address 0x4 - core index']
  #allocation1 [shape = 'u32[72,128]{1,0:T(1,128)}', space=vmem, size = 0x9000, scoped, tag = 'internal scratch']
  %s0 = inlined_call_operand.hbm [shape: f32[2,32,256], index: 0, kind: input, shape index: {}]
  %s1 = inlined_call_operand.vmem [shape: f32[32,2], index: 1, kind: input, shape index: {}]
  %s2 = inlined_call_operand.vmem [shape: f32[1,2], index: 2, kind: input, shape index: {}]
  %s3 = inlined_call_operand.vmem [shape: f32[2,32], index: 3, kind: input, shape index: {}]
  %s4 = inlined_call_operand.vmem [shape: f32[1,32], index: 4, kind: input, shape index: {}]
  %s5 = inlined_call_operand.hbm [shape: f32[2,32,256], index: 5, kind: output, shape index: {}]
  %s6 = sld [smem:[#allocation0]]
  $region34: #{tpu_custom_call.1} parent=0
    _
  %s8 = ssub.s32 1, %s6
  %s9 = scalar_select 0, %s8, %s6
  $region1: #{tpu_custom_call.1} parent=0
    #allocation2 [shape = 'u8[65536]{0}', space=vmem, size = 0x10000, scoped, tag = 'input window, operand 0, single buffered']
    #allocation3 [shape = 's32[1]{0}', space=sflag, size = 0x4, scoped, tag = 'scoped memory for tpu_custom_call.1']
    #allocation4 [shape = 's32[1]{0}', space=sflag, size = 0x4, scoped, tag = 'scoped memory for tpu_custom_call.1']
    #allocation5 [shape = 'u8[65536]{0}', space=vmem, size = 0x10000, scoped, tag = 'output window, operand 0, single buffered']
    %10 = vsyncpa [#allocation3], 0
    %11 = vsyncpa [#allocation4], 0
    // Predicated region
    $region2: #{tpu_custom_call.1} parent=1 // pred_check
      _
    $region3: #{tpu_custom_call.1} parent=1 // pred_check_branch
      %13 = sbr.rel (0) target = $region5
    $region4: #{tpu_custom_call.1} parent=1 // pred_region
      %15 = vsyncadd [#allocation3], 0
      %s16 = sshll.u32 %s0, 4
      %s17 = int_to_ptr.hbm [resolvable:$true] %s16
      %s18 = sshll.u32 [#allocation2], 4
      %s19 = int_to_ptr.vmem [resolvable:$true] %s18
      %24 = dma.hbm_to_vmem [thread:$0]  %s17, 2048, %s19, [#allocation3], 256, 256, 16
    $region5: #{tpu_custom_call.1} parent=1 // pred_fallthru
      _
    // Predicated region
    $region6: #{tpu_custom_call.1} parent=1 // pred_check
      _
    $region7: #{tpu_custom_call.1} parent=1 // pred_check_branch
      %26 = sbr.rel (0) target = $region9
    $region8: #{tpu_custom_call.1} parent=1 // pred_region
      _
    $region9: #{tpu_custom_call.1} parent=1 // pred_fallthru
      _
    // Predicated region
    $region10: #{tpu_custom_call.1} parent=1 // pred_check
      _
    $region11: #{tpu_custom_call.1} parent=1 // pred_check_branch
      %28 = sbr.rel (0) target = $region13
    $region12: #{tpu_custom_call.1} parent=1 // pred_region
      _
    $region13: #{tpu_custom_call.1} parent=1 // pred_fallthru
      _
    // Predicated region
    $region14: #{tpu_custom_call.1} parent=1 // pred_check
      _
    $region15: #{tpu_custom_call.1} parent=1 // pred_check_branch
      %30 = sbr.rel (0) target = $region17
    $region16: #{tpu_custom_call.1} parent=1 // pred_region
      _
    $region17: #{tpu_custom_call.1} parent=1 // pred_fallthru
      _
    // Predicated region
    $region18: #{tpu_custom_call.1} parent=1 // pred_check
      _
    $region19: #{tpu_custom_call.1} parent=1 // pred_check_branch
      %32 = sbr.rel (0) target = $region21
    $region20: #{tpu_custom_call.1} parent=1 // pred_region
      _
    $region21: #{tpu_custom_call.1} parent=1 // pred_fallthru
      _
    // Predicated region
    $region22: #{tpu_custom_call.1} parent=1 // pred_check
      _
    $region23: #{tpu_custom_call.1} parent=1 // pred_check_branch
      %34 = sbr.rel (0) target = $region25
    $region24: #{tpu_custom_call.1} parent=1 // pred_region
      %36 = dma.done [#allocation3], 2048
    $region25: #{tpu_custom_call.1} parent=1 // pred_fallthru
      _
    %v37 = vld [vmem:[#allocation2] sm:$0xff]
    %v38 = vld [vmem:[#allocation2 + $0x8] sm:$0xff]
    %v39 = vld [vmem:[#allocation2 + $0x10] sm:$0xff]
    %v40 = vld [vmem:[#allocation2 + $0x18] sm:$0xff]
    %v41 = vld [vmem:[#allocation2 + $0x20] sm:$0xff]
    %v42 = vld [vmem:[#allocation2 + $0x28] sm:$0xff]
    %v43 = vld [vmem:[#allocation2 + $0x30] sm:$0xff]
    %v44 = vld [vmem:[#allocation2 + $0x38] sm:$0xff]
    %v45 = vld [vmem:[#allocation2 + $0x40] sm:$0xff]
    %v46 = vld [vmem:[#allocation2 + $0x48] sm:$0xff]
    %v47 = vld [vmem:[#allocation2 + $0x50] sm:$0xff]
    %v48 = vld [vmem:[#allocation2 + $0x58] sm:$0xff]
    %v49 = vld [vmem:[#allocation2 + $0x60] sm:$0xff]
    %v50 = vld [vmem:[#allocation2 + $0x68] sm:$0xff]
    %v51 = vld [vmem:[#allocation2 + $0x70] sm:$0xff]
    %v52 = vld [vmem:[#allocation2 + $0x78] sm:$0xff]
    %v53 = vmax.f32 %v37, %v38
    %54 = vmax.xlane.f32.xlu0 %v53
    %v55 = vpop.xlane.xlu0 %54
    %v56 = vmax.f32 %v39, %v40
    %57 = vmax.xlane.f32.xlu0 %v56
    %v58 = vpop.xlane.xlu0 %57
    %v59 = vmax.f32 %v41, %v42
    %60 = vmax.xlane.f32.xlu0 %v59
    %v61 = vpop.xlane.xlu0 %60
    %v62 = vmax.f32 %v43, %v44
    %63 = vmax.xlane.f32.xlu0 %v62
    %v64 = vpop.xlane.xlu0 %63
    %v65 = vmax.f32 %v45, %v46
    %66 = vmax.xlane.f32.xlu0 %v65
    %v67 = vpop.xlane.xlu0 %66
    %v68 = vmax.f32 %v47, %v48
    %69 = vmax.xlane.f32.xlu0 %v68
    %v70 = vpop.xlane.xlu0 %69
    %v71 = vmax.f32 %v49, %v50
    %72 = vmax.xlane.f32.xlu0 %v71
    %v73 = vpop.xlane.xlu0 %72
    %v74 = vmax.f32 %v51, %v52
    %75 = vmax.xlane.f32.xlu0 %v74
    %v76 = vpop.xlane.xlu0 %75
    %v77 = vadd.f32 %v37, %v38
    %78 = vadd.xlane.f32.xlu0 %v77
    %v79 = vpop.xlane.xlu0 %78
    %v80 = vadd.f32 %v39, %v40
    %81 = vadd.xlane.f32.xlu0 %v80
    %v82 = vpop.xlane.xlu0 %81
    %v83 = vadd.f32 %v41, %v42
    %84 = vadd.xlane.f32.xlu0 %v83
    %v85 = vpop.xlane.xlu0 %84
    %v86 = vadd.f32 %v43, %v44
    %87 = vadd.xlane.f32.xlu0 %v86
    %v88 = vpop.xlane.xlu0 %87
    %v89 = vadd.f32 %v45, %v46
    %90 = vadd.xlane.f32.xlu0 %v89
    %v91 = vpop.xlane.xlu0 %90
    %v92 = vadd.f32 %v47, %v48
    %93 = vadd.xlane.f32.xlu0 %v92
    %v94 = vpop.xlane.xlu0 %93
    %v95 = vadd.f32 %v49, %v50
    %96 = vadd.xlane.f32.xlu0 %v95
    %v97 = vpop.xlane.xlu0 %96
    %v98 = vadd.f32 %v51, %v52
    %99 = vadd.xlane.f32.xlu0 %v98
    %v100 = vpop.xlane.xlu0 %99
    %v101 = vmul.f32 %v79, 0.00390625
    %v102 = vmul.f32 %v82, 0.00390625
    %v103 = vmul.f32 %v85, 0.00390625
    %v104 = vmul.f32 %v88, 0.00390625
    %v105 = vmul.f32 %v91, 0.00390625
    %v106 = vmul.f32 %v94, 0.00390625
    %v107 = vmul.f32 %v97, 0.00390625
    %v108 = vmul.f32 %v100, 0.00390625
    %v117 = vlaneseq
    %v118 = vand.u32 %v117, 127
    %v119 = vperm.slane %v55, %v118
    %v120 = vadd.s32 %v118, 4294967288
    %v121 = vperm.slane %v58, %v120
    %vm122 = vcmask 130112
    %v123 = vsel %vm122, %v121, %v119
    %v124 = vadd.s32 %v118, 4294967280
    %v125 = vperm.slane %v61, %v124
    %vm126 = vcmask 195712
    %v127 = vsel %vm126, %v125, %v123
    %v128 = vadd.s32 %v118, 4294967272
    %v129 = vperm.slane %v64, %v128
    %vm130 = vcmask 261312
    %v131 = vsel %vm130, %v129, %v127
    %v132 = vperm.slane %v67, %v118
    %v133 = vperm.slane %v70, %v120
    %v134 = vsel %vm122, %v133, %v132
    %v135 = vperm.slane %v73, %v124
    %v136 = vsel %vm126, %v135, %v134
    %v137 = vperm.slane %v76, %v128
    %v138 = vsel %vm130, %v137, %v136
    %vm139 = vcmask 1041409
    %v140 = vsel %vm139, %v138, %v131
    %v150 = vperm.slane %v101, %v118
    %v151 = vperm.slane %v102, %v120
    %v152 = vsel %vm122, %v151, %v150
    %v153 = vperm.slane %v103, %v124
    %v154 = vsel %vm126, %v153, %v152
    %v155 = vperm.slane %v104, %v128
    %v156 = vsel %vm130, %v155, %v154
    %v157 = vperm.slane %v105, %v118
    %v158 = vperm.slane %v106, %v120
    %v159 = vsel %vm122, %v158, %v157
    %v160 = vperm.slane %v107, %v124
    %v161 = vsel %vm126, %v160, %v159
    %v162 = vperm.slane %v108, %v128
    %v163 = vsel %vm130, %v162, %v161
    %vm164 = vcmask 1043459
    %v165 = vsel %vm164, %v163, %v156
    %vm167 = vcmask 1041408
    %v168 = vsel %vm167, %v140, %v165
    %v169 = vld [vmem:[%s1] sm:$0xff]
    %v170 = vld [vmem:[%s1 + $0x8] sm:$0xff]
    %v171 = vld [vmem:[%s1 + $0x10] sm:$0xff]
    %v172 = vld [vmem:[%s1 + $0x18] sm:$0xff]
    %v173 = vld [vmem:[%s2] sm:$0x1]
    %v175 = vperm.slane %v173, 0
    %vm177 = vcmask 261120
    %v179 = vsel %vm177, %v168, 0
    %181 = vmatpush.msra.mxu0 0.0
    %182 = vmatpush.msra.mxu0 0.0
    %183 = vmatpush.msra.mxu0 0.0
    %184 = vmatpush.msra.mxu0 0.0
    %185 = vmatpush.msra.mxu0 0.0
    %186 = vmatpush.msra.mxu0 0.0
    %187 = vmatpush.msra.mxu0 0.0
    %188 = vmatpush.msra.mxu0 0.0
    %189 = vmatpush.msra.mxu0 0.0
    %190 = vmatpush.msra.mxu0 0.0
    %191 = vmatpush.msra.mxu0 0.0
    %192 = vmatpush.msra.mxu0 0.0
    %193 = vmatpush.msra.mxu0 %v172
    %194 = vmatpush.msra.mxu0 %v171
    %195 = vmatpush.msra.mxu0 %v170
    %196 = vmatpush.msra.mxu0 %v169
    %197 = vmatmul.f32.gmra.mxu0 %v179
    %v198 = vpop.f32.mrf.mxu0
    %v199 = vadd.f32 %v175, %v198
    %200 = vdwg.mxu0
    %v201 = vmax.f32 %v199, 0.0
    %v202 = vld [vmem:[%s3] sm:$0x3]
    %v203 = vld [vmem:[%s4] sm:$0x1]
    %v205 = vperm.slane %v203, 0
    %vm207 = vcmask 15360
    %v209 = vsel %vm207, %v201, 0
    %v212 = vsel %vm167, %v202, 0
    %214 = vmatpush.msra.mxu0 0.0
    %215 = vmatpush.msra.mxu0 0.0
    %216 = vmatpush.msra.mxu0 0.0
    %217 = vmatpush.msra.mxu0 0.0
    %218 = vmatpush.msra.mxu0 0.0
    %219 = vmatpush.msra.mxu0 0.0
    %220 = vmatpush.msra.mxu0 0.0
    %221 = vmatpush.msra.mxu0 0.0
    %222 = vmatpush.msra.mxu0 0.0
    %223 = vmatpush.msra.mxu0 0.0
    %224 = vmatpush.msra.mxu0 0.0
    %225 = vmatpush.msra.mxu0 0.0
    %226 = vmatpush.msra.mxu0 0.0
    %227 = vmatpush.msra.mxu0 0.0
    %228 = vmatpush.msra.mxu0 0.0
    %229 = vmatpush.msra.mxu0 %v212
    %230 = vmatmul.f32.gmra.mxu0 %v209
    %v231 = vpop.f32.mrf.mxu0
    %v232 = vadd.f32 %v205, %v231
    %233 = vdwg.mxu0
    %v235 = vrot.slane %v232, 2
    %v237 = vadd.f32 %v232, %v235
    %v238 = vxor.u32 %v237, 2147483648
    %v239 = vmul.f32 %v238, 1.442695
    %v240 = vpow.pop %v239
    %v241 = vadd.f32 %v240, 1.0
    %v242 = vrcp.pop %v241
    %v243 = vmul.f32 %v241, %v242
    %v244 = vsub.f32 1.0, %v243
    %v245 = vmul.f32 %v242, %v244
    %v246 = vadd.f32 %v242, %v245
    %vm247 = vweird.f32 %v241
    %vm248 = vweird.f32 %v242
    %vm249 = vmor %vm247, %vm248
    %v250 = vsel %vm249, %v242, %v246
    %v251 = vand.u32 2147483647, %v241
    %vm252 = vcmp.eq.f32.partialorder %v251, 8.507059e+37
    %v253 = vand.u32 %v241, 2147483648
    %v254 = vor.u32 1.1754944e-38, %v253
    %v255 = vsel %vm252, %v254, %v250
    %v256 = vmul.f32 1.0, %v255
    %v257 = vperm.slane %v256, 0
    %v258 = vlaneseq
    %v259 = vshrl.u32 %v258, 7
    %261 = vset.pattern.permute.xlu0 %v259
    %262 = vperm.xlu0 %261, %v257
    %v263 = vpop.permute.xlu0 %262
    %v264 = vlaneseq
    %v265 = vshrl.u32 %v264, 7
    %v266 = vadd.s32 %v265, 8
    %267 = vset.pattern.permute.xlu0 %v266
    %268 = vperm.xlu0 %267, %v257
    %v269 = vpop.permute.xlu0 %268
    %v270 = vlaneseq
    %v271 = vshrl.u32 %v270, 7
    %v272 = vadd.s32 %v271, 16
    %273 = vset.pattern.permute.xlu0 %v272
    %274 = vperm.xlu0 %273, %v257
    %v275 = vpop.permute.xlu0 %274
    %v276 = vlaneseq
    %v277 = vshrl.u32 %v276, 7
    %v278 = vadd.s32 %v277, 24
    %279 = vset.pattern.permute.xlu0 %v278
    %280 = vperm.xlu0 %279, %v257
    %v281 = vpop.permute.xlu0 %280
    %v282 = vperm.slane %v256, 1
    %v283 = vlaneseq
    %v284 = vshrl.u32 %v283, 7
    %286 = vset.pattern.permute.xlu0 %v284
    %287 = vperm.xlu0 %286, %v282
    %v288 = vpop.permute.xlu0 %287
    %v289 = vlaneseq
    %v290 = vshrl.u32 %v289, 7
    %v291 = vadd.s32 %v290, 8
    %292 = vset.pattern.permute.xlu0 %v291
    %293 = vperm.xlu0 %292, %v282
    %v294 = vpop.permute.xlu0 %293
    %v295 = vlaneseq
    %v296 = vshrl.u32 %v295, 7
    %v297 = vadd.s32 %v296, 16
    %298 = vset.pattern.permute.xlu0 %v297
    %299 = vperm.xlu0 %298, %v282
    %v300 = vpop.permute.xlu0 %299
    %v301 = vlaneseq
    %v302 = vshrl.u32 %v301, 7
    %v303 = vadd.s32 %v302, 24
    %304 = vset.pattern.permute.xlu0 %v303
    %305 = vperm.xlu0 %304, %v282
    %v306 = vpop.permute.xlu0 %305
    %v307 = vmul.f32 %v37, %v263
    %v308 = vmul.f32 %v38, %v263
    %v309 = vmul.f32 %v39, %v269
    %v310 = vmul.f32 %v40, %v269
    %v311 = vmul.f32 %v41, %v275
    %v312 = vmul.f32 %v42, %v275
    %v313 = vmul.f32 %v43, %v281
    %v314 = vmul.f32 %v44, %v281
    %v315 = vmul.f32 %v45, %v288
    %v316 = vmul.f32 %v46, %v288
    %v317 = vmul.f32 %v47, %v294
    %v318 = vmul.f32 %v48, %v294
    %v319 = vmul.f32 %v49, %v300
    %v320 = vmul.f32 %v50, %v300
    %v321 = vmul.f32 %v51, %v306
    %v322 = vmul.f32 %v52, %v306
    %323 = vst [vmem:[#allocation5] sm:$0xff] %v307
    %324 = vst [vmem:[#allocation5 + $0x8] sm:$0xff] %v308
    %325 = vst [vmem:[#allocation5 + $0x10] sm:$0xff] %v309
    %326 = vst [vmem:[#allocation5 + $0x18] sm:$0xff] %v310
    %327 = vst [vmem:[#allocation5 + $0x20] sm:$0xff] %v311
    %328 = vst [vmem:[#allocation5 + $0x28] sm:$0xff] %v312
    %329 = vst [vmem:[#allocation5 + $0x30] sm:$0xff] %v313
    %330 = vst [vmem:[#allocation5 + $0x38] sm:$0xff] %v314
    %331 = vst [vmem:[#allocation5 + $0x40] sm:$0xff] %v315
    %332 = vst [vmem:[#allocation5 + $0x48] sm:$0xff] %v316
    %333 = vst [vmem:[#allocation5 + $0x50] sm:$0xff] %v317
    %334 = vst [vmem:[#allocation5 + $0x58] sm:$0xff] %v318
    %335 = vst [vmem:[#allocation5 + $0x60] sm:$0xff] %v319
    %336 = vst [vmem:[#allocation5 + $0x68] sm:$0xff] %v320
    %337 = vst [vmem:[#allocation5 + $0x70] sm:$0xff] %v321
    %338 = vst [vmem:[#allocation5 + $0x78] sm:$0xff] %v322
    // Predicated region
    $region26: #{tpu_custom_call.1} parent=1 // pred_check
      _
    $region27: #{tpu_custom_call.1} parent=1 // pred_check_branch
      %340 = sbr.rel (0) target = $region29
    $region28: #{tpu_custom_call.1} parent=1 // pred_region
      %342 = vsyncadd [#allocation4], 0
      %s343 = sshll.u32 [#allocation5], 4
      %s344 = int_to_ptr.vmem [resolvable:$true] %s343
      %s345 = sshll.u32 %s5, 4
      %s346 = int_to_ptr.hbm [resolvable:$true] %s345
      %351 = dma.vmem_to_hbm [thread:$0]  %s344, 2048, %s346, [#allocation4], 256, 256, 16
    $region29: #{tpu_custom_call.1} parent=1 // pred_fallthru
      _
    // Predicated region
    $region30: #{tpu_custom_call.1} parent=1 // pred_check
      _
    $region31: #{tpu_custom_call.1} parent=1 // pred_check_branch
      %353 = sbr.rel (0) target = $region33
    $region32: #{tpu_custom_call.1} parent=1 // pred_region
      %355 = dma.done [#allocation4], 2048
    $region33: #{tpu_custom_call.1} parent=1 // pred_fallthru
      _
    %356 = vsyncpa [#allocation3], 1
    %357 = vsyncpa [#allocation4], 1

</llo_original>
